<compile_context>
chip_gen: v6e
topology: v6e:2x2x1
jax: 0.10.0
libtpu: 0.0.40
codegen_flags: <defaults>
</compile_context>

<pallas_src>
import functools

import jax
import jax.numpy as jnp
from jax.experimental import pallas as pl
from jax.experimental.pallas import tpu as pltpu


# ----------------------------------------------------------------------------
# Table construction -- mirrors xpos.__init__ (init-time glue, plain JAX).
# Returns:
#   raw   = (c, s, t, invt), each (L, D)  -- used by the pure-JAX reference
#   fused = (4, L, D) stacked tables [c*t, sgn*s*t, c/t, sgn*s/t]
#           where sgn = -1 on even lanes (fold of rotate_every_two's minus).
# ----------------------------------------------------------------------------
def make_xpos_tables(key_head_size: int, max_sequence_length: int = 1024):
    if key_head_size % 2 != 0:
        raise ValueError("key head size must be divisible by 2")
    D = key_head_size
    theta_base = 10000.0
    alpha = 0.4 * D
    drange = jnp.arange(2, D + 2, 2, dtype=jnp.float32)              # (D/2,)
    theta = jnp.power(1.0 / theta_base, drange / D)
    theta = jnp.repeat(theta, 2)                                      # (D,)
    zeta = (drange / (D / 2.0) + alpha) / (1.0 + alpha)
    zeta = jnp.repeat(zeta, 2)                                        # (D,)
    scale_base = 512.0
    half = max_sequence_length // 2
    seq = (
        jnp.arange(-half, max_sequence_length - half, dtype=jnp.float32)
        / scale_base
    )                                                                 # (L,)
    c = jnp.cos(seq[:, None] * theta[None, :])                        # (L, D)
    s = jnp.sin(seq[:, None] * theta[None, :])                        # (L, D)
    t = zeta[None, :] ** seq[:, None]                                 # (L, D)
    invt = 1.0 / t

    # rotate_every_two(x)[2i] = -x[2i+1]: fold the minus into even lanes of
    # the sin tables so the kernel needs no negate and no final scale pass.
    sign = jnp.where((jnp.arange(D) % 2) == 0, -1.0, 1.0)[None, :]    # (1, D)
    fused = jnp.stack(
        [c * t, s * t * sign, c * invt, s * invt * sign], axis=0
    ).astype(jnp.float32)                                             # (4, L, D)
    return (c, s, t, invt), fused


# ----------------------------------------------------------------------------
# Init-time head pre-tiling of the fused tables.
# Replicate the compact (.., D) tables across `rep` heads so the per-tile
# in-kernel head broadcast is either gone (rep == H) or reduced to a concat of
# 128-lane-aligned pieces.  Width is capped at max(D, 128) <= H*D, so table
# HBM traffic never exceeds the q/k streams.
# ----------------------------------------------------------------------------
def _head_replication(num_heads: int, D: int) -> int:
    H = num_heads
    if D >= 128:
        return 1                      # pieces already vreg-aligned
    if H * D <= 128:
        return H                      # fully pre-tile; no in-kernel concat
    rep = min(H, max(1, 128 // D))
    while rep > 1 and (H % rep != 0 or (rep * D) % 128 != 0):
        rep -= 1
    return rep


def prepare_xpos_tables(fused, num_heads: int):
    """(4, L, D) -> (4, L, rep*D); one-off init-time cost."""
    rep = _head_replication(num_heads, fused.shape[-1])
    if rep > 1:
        fused = jnp.tile(fused, (1, 1, rep))
    return fused


# ----------------------------------------------------------------------------
# Pallas kernel: out_q = q*ct + rot(q)*st ; out_k = k*ci + rot(k)*si
# with rot(x)[even lane] = x[lane+1], rot(x)[odd lane] = x[lane-1].
# Tables arrive at width W (multiple of D); `reps` = H*D // W head copies.
# ----------------------------------------------------------------------------
def _xpos_kernel(tbl_ref, q_ref, k_ref, qo_ref, ko_ref, *, reps):
    q = q_ref[...]                              # (ts, H*D)
    k = k_ref[...]
    HD = q.shape[-1]

    def expand(x):                              # (ts, W) -> (ts, H*D)
        if reps == 1:
            return x
        # Pieces are 128-lane aligned (W % 128 == 0 whenever reps > 1), so the
        # concat is whole-vreg copies, not cross-lane shuffles.
        return jnp.concatenate([x] * reps, axis=-1)

    ct = expand(tbl_ref[0])                     # c * t
    st = expand(tbl_ref[1])                     # +/- s * t  (sign pre-folded)
    ci = expand(tbl_ref[2])                     # c * invt
    si = expand(tbl_ref[3])                     # +/- s * invt

    # Lane-parity mask: built once at (1, HD), broadcast over sublanes.
    lane = jax.lax.broadcasted_iota(jnp.int32, (1, HD), 1)
    even = (lane % 2) == 0

    def rot(x):
        # Even lanes take x[i+1], odd lanes take x[i-1]. The circular wrap of
        # roll is never selected (lane 0 is even, lane HD-1 is odd), and since
        # D is even the (2i, 2i+1) pairs never straddle a head boundary.
        left = pltpu.roll(x, HD - 1, axis=1)    # == roll by -1
        right = pltpu.roll(x, 1, axis=1)
        return jnp.where(even, left, right)

    qo_ref[...] = (q * ct + rot(q) * st).astype(qo_ref.dtype)
    ko_ref[...] = (k * ci + rot(k) * si).astype(ko_ref.dtype)


# ----------------------------------------------------------------------------
# Generation-aware scoped-VMEM limit.
# ----------------------------------------------------------------------------
def _round_up(x: int, m: int) -> int:
    return ((x + m - 1) // m) * m


def _vmem_limit_bytes() -> int:
    phys = 64 * 1024 * 1024                     # conservative default (v7x)
    try:
        info = pltpu.get_tpu_info()
        phys = int(getattr(info, "vmem_capacity_bytes", phys) or phys)
    except Exception:
        pass
    # 128-MiB parts (v5e/v6e): 48 MiB scoped; 64-MiB v7x: 32 MiB scoped.
    return min(phys // 2, 48 * 1024 * 1024)


# ----------------------------------------------------------------------------
# Tile sizing: biggest sequence tile whose *lane-padded*, double-buffered
# working set fits in ~60% of the scoped VMEM limit, while keeping the grid
# multi-step (>= ~4 steps when S allows) for pipelining / v7x dual-TC split.
# ----------------------------------------------------------------------------
def _pick_seq_tile(S, HD, W, itemsize, vmem_limit_bytes):
    sub = 16 if itemsize == 2 else 8            # bf16 tiles need 16 sublanes
    hd_pad = _round_up(HD, 128)                 # VMEM lane padding to 128
    w_pad = _round_up(max(W, 1), 128)
    # double-buffered bytes/row: q,k in + q,k out (HD) + 4 fused tables (W)
    per_row = 2 * (4 * hd_pad + 4 * w_pad) * itemsize
    budget = int(vmem_limit_bytes * 0.6)        # headroom for Mosaic scratch
    max_ts = max(sub, (budget // per_row) // sub * sub)
    # >= ~4 grid steps (>= 2 per v7x TensorCore), floor ~512 rows
    target = max(512, _round_up(pl.cdiv(S, 4), sub))
    ts = min(max_ts, target, _round_up(S, sub))
    return max(ts, sub)


# ----------------------------------------------------------------------------
# Wrapper.  start/end must be static Python ints (as in the module's usage);
# use scalar prefetch / lax.dynamic_slice if they ever become traced.
# ----------------------------------------------------------------------------
def xpos_apply(queries, keys, prepared_tables, start: int, end: int):
    """queries, keys: (S, H, D); prepared_tables: (4, L, W) with W % D == 0."""
    S, H, D = queries.shape
    assert keys.shape == (S, H, D)
    assert end - start == S
    HD = H * D
    W = prepared_tables.shape[-1]
    assert HD % W == 0, "prepared table width must divide H*D"
    reps = HD // W

    # Lane-dense layout: contiguous, free reshape to (S, H*D).
    q2 = queries.reshape(S, HD)
    k2 = keys.reshape(S, HD)
    tbl = prepared_tables[:, start:end, :]      # (4, S, W), static slice

    itemsize = jnp.dtype(queries.dtype).itemsize
    vmem_limit = _vmem_limit_bytes()
    ts = _pick_seq_tile(S, HD, W, itemsize, vmem_limit)
    grid = (pl.cdiv(S, ts),)                    # ragged last block is clipped
                                                # by Pallas -- no jnp.pad copies

    qk_spec = pl.BlockSpec((ts, HD), lambda i: (i, 0))
    tbl_spec = pl.BlockSpec((4, ts, W), lambda i: (0, i, 0))

    q_out, k_out = pl.pallas_call(
        functools.partial(_xpos_kernel, reps=reps),
        out_shape=(
            jax.ShapeDtypeStruct((S, HD), queries.dtype),
            jax.ShapeDtypeStruct((S, HD), keys.dtype),
        ),
        grid_spec=pltpu.PrefetchScalarGridSpec(
            num_scalar_prefetch=0,
            grid=grid,
            in_specs=[tbl_spec, qk_spec, qk_spec],
            out_specs=[qk_spec, qk_spec],
        ),
        compiler_params=pltpu.CompilerParams(
            dimension_semantics=("parallel",),
            vmem_limit_bytes=vmem_limit,
        ),
    )(tbl, q2, k2)

    return q_out.reshape(S, H, D), k_out.reshape(S, H, D)


# ----------------------------------------------------------------------------
# Pure-JAX reference (original, un-fused formulation) for correctness check
# ----------------------------------------------------------------------------
def _rotate_every_two_ref(x):
    return jnp.stack((-x[..., 1::2], x[..., 0::2]), axis=-1).reshape(x.shape)


def xpos_ref(queries, keys, c, s, t, invt, start, end):
    cc = c[start:end][:, None, :]
    ss = s[start:end][:, None, :]
    tt = t[start:end][:, None, :]
    ii = invt[start:end][:, None, :]
    q = (queries * cc + _rotate_every_two_ref(queries) * ss) * tt
    k = (keys * cc + _rotate_every_two_ref(keys) * ss) * ii
    return q, k


# ----------------------------------------------------------------------------
# Main
# ----------------------------------------------------------------------------
if __name__ == "__main__":
    D = 32          # key head size
    H = 4           # heads  (H * D = 128 -> one full lane width)
    S = 8           # sequence chunk length
    MAX_SEQ = 1024
    start, end = 500, 500 + S

    key = jax.random.PRNGKey(0)
    kq, kk = jax.random.split(key)
    queries = jax.random.normal(kq, (S, H, D), dtype=jnp.float32)
    keys = jax.random.normal(kk, (S, H, D), dtype=jnp.float32)

    (c, s, t, invt), fused = make_xpos_tables(D, MAX_SEQ)
    prepared = prepare_xpos_tables(fused, H)    # one-off init-time pre-tile

    q_out, k_out = xpos_apply(queries, keys, prepared, start, end)
    jax.block_until_ready((q_out, k_out))

    q_ref, k_ref = xpos_ref(queries, keys, c, s, t, invt, start, end)
    assert jnp.allclose(q_out, q_ref, atol=2e-5, rtol=2e-5)
    assert jnp.allclose(k_out, k_ref, atol=2e-5, rtol=2e-5)

    print("KERNEL_OK")
</pallas_src>

<mosaic_0001>
module attributes {stable_mosaic.version = 11 : i64} {
  func.func @_xpos_kernel(%arg0: i32, %arg1: memref<4x8x128xf32, #tpu.memory_space<vmem>>, %arg2: memref<8x128xf32, #tpu.memory_space<vmem>>, %arg3: memref<8x128xf32, #tpu.memory_space<vmem>>, %arg4: memref<8x128xf32, #tpu.memory_space<vmem>>, %arg5: memref<8x128xf32, #tpu.memory_space<vmem>>) attributes {dimension_semantics = [#tpu.dimension_semantics<parallel>], iteration_bounds = array<i64: 1>, scalar_prefetch = 0 : i64, scratch_operands = 0 : i64, tpu.core_type = #tpu.core_type<tc>, window_params = [{transform_indices = @transform_0, window_bounds = array<i64: 4, 8, 128>}, {transform_indices = @transform_1, window_bounds = array<i64: 8, 128>}, {transform_indices = @transform_2, window_bounds = array<i64: 8, 128>}, {transform_indices = @transform_3, window_bounds = array<i64: 8, 128>}, {transform_indices = @transform_4, window_bounds = array<i64: 8, 128>}]} {
    %c0 = arith.constant 0 : index
    %c0_0 = arith.constant 0 : index
    %0 = vector.load %arg2[%c0, %c0_0] : memref<8x128xf32, #tpu.memory_space<vmem>>, vector<8x128xf32>
    %c0_1 = arith.constant 0 : index
    %c0_2 = arith.constant 0 : index
    %1 = vector.load %arg3[%c0_1, %c0_2] : memref<8x128xf32, #tpu.memory_space<vmem>>, vector<8x128xf32>
    %c0_3 = arith.constant 0 : index
    %c0_4 = arith.constant 0 : index
    %c0_5 = arith.constant 0 : index
    %2 = vector.load %arg1[%c0_3, %c0_4, %c0_5] : memref<4x8x128xf32, #tpu.memory_space<vmem>>, vector<1x8x128xf32>
    %3 = vector.shape_cast %2 : vector<1x8x128xf32> to vector<8x128xf32>
    %c1 = arith.constant 1 : index
    %c0_6 = arith.constant 0 : index
    %c0_7 = arith.constant 0 : index
    %4 = vector.load %arg1[%c1, %c0_6, %c0_7] : memref<4x8x128xf32, #tpu.memory_space<vmem>>, vector<1x8x128xf32>
    %5 = vector.shape_cast %4 : vector<1x8x128xf32> to vector<8x128xf32>
    %c2 = arith.constant 2 : index
    %c0_8 = arith.constant 0 : index
    %c0_9 = arith.constant 0 : index
    %6 = vector.load %arg1[%c2, %c0_8, %c0_9] : memref<4x8x128xf32, #tpu.memory_space<vmem>>, vector<1x8x128xf32>
    %7 = vector.shape_cast %6 : vector<1x8x128xf32> to vector<8x128xf32>
    %c3 = arith.constant 3 : index
    %c0_10 = arith.constant 0 : index
    %c0_11 = arith.constant 0 : index
    %8 = vector.load %arg1[%c3, %c0_10, %c0_11] : memref<4x8x128xf32, #tpu.memory_space<vmem>>, vector<1x8x128xf32>
    %9 = vector.shape_cast %8 : vector<1x8x128xf32> to vector<8x128xf32>
    %10 = tpu.iota {dimensions = array<i32: 1>} : vector<1x128xi32>
    %c2_i32 = arith.constant 2 : i32
    %c0_i32 = arith.constant 0 : i32
    %11 = arith.cmpi eq, %c2_i32, %c0_i32 : i32
    %c1_i32 = arith.constant 1 : i32
    %12 = arith.select %11, %c1_i32, %c2_i32 : i32
    %13 = vector.broadcast %12 : i32 to vector<1x128xi32>
    %14 = arith.remsi %10, %13 : vector<1x128xi32>
    %c0_i32_12 = arith.constant 0 : i32
    %15 = vector.broadcast %c0_i32_12 : i32 to vector<1x128xi32>
    %16 = arith.cmpi ne, %14, %15 : vector<1x128xi32>
    %c0_i32_13 = arith.constant 0 : i32
    %17 = vector.broadcast %c0_i32_13 : i32 to vector<1x128xi32>
    %18 = arith.cmpi slt, %14, %17 : vector<1x128xi32>
    %c0_i32_14 = arith.constant 0 : i32
    %19 = arith.cmpi slt, %12, %c0_i32_14 : i32
    %20 = vector.broadcast %19 : i1 to vector<1x128xi1>
    %21 = vector.broadcast %20 : vector<1x128xi1> to vector<1x128xi1>
    %22 = arith.xori %18, %21 : vector<1x128xi1>
    %23 = arith.andi %22, %16 : vector<1x128xi1>
    %24 = vector.broadcast %12 : i32 to vector<1x128xi32>
    %25 = arith.addi %14, %24 : vector<1x128xi32>
    %26 = arith.select %23, %25, %14 : vector<1x128xi1>, vector<1x128xi32>
    %c0_i32_15 = arith.constant 0 : i32
    %27 = vector.broadcast %c0_i32_15 : i32 to vector<1x128xi32>
    %28 = arith.cmpi eq, %26, %27 : vector<1x128xi32>
    %29 = arith.mulf %0, %3 : vector<8x128xf32>
    %c127_i32 = arith.constant 127 : i32
    %30 = tpu.dynamic_rotate %0 by %c127_i32 dim 1 : vector<8x128xf32>, i32 -> vector<8x128xf32>
    %c1_i32_16 = arith.constant 1 : i32
    %31 = tpu.dynamic_rotate %0 by %c1_i32_16 dim 1 : vector<8x128xf32>, i32 -> vector<8x128xf32>
    %32 = vector.shape_cast %28 : vector<1x128xi1> to vector<1x128xi1>
    %33 = vector.broadcast %32 : vector<1x128xi1> to vector<8x128xi1>
    %34 = arith.select %33, %30, %31 : vector<8x128xi1>, vector<8x128xf32>
    %35 = arith.mulf %34, %5 : vector<8x128xf32>
    %36 = arith.addf %29, %35 : vector<8x128xf32>
    %c0_17 = arith.constant 0 : index
    %c0_18 = arith.constant 0 : index
    %37 = vector.load %arg4[%c0_17, %c0_18] : memref<8x128xf32, #tpu.memory_space<vmem>>, vector<8x128xf32>
    tpu.vector_store %arg4[%c0_17, %c0_18], %36 {strides = array<i32>} : memref<8x128xf32, #tpu.memory_space<vmem>>, vector<8x128xf32>,
    %38 = arith.mulf %1, %7 : vector<8x128xf32>
    %c127_i32_19 = arith.constant 127 : i32
    %39 = tpu.dynamic_rotate %1 by %c127_i32_19 dim 1 : vector<8x128xf32>, i32 -> vector<8x128xf32>
    %c1_i32_20 = arith.constant 1 : i32
    %40 = tpu.dynamic_rotate %1 by %c1_i32_20 dim 1 : vector<8x128xf32>, i32 -> vector<8x128xf32>
    %41 = vector.shape_cast %28 : vector<1x128xi1> to vector<1x128xi1>
    %42 = vector.broadcast %41 : vector<1x128xi1> to vector<8x128xi1>
    %43 = arith.select %42, %39, %40 : vector<8x128xi1>, vector<8x128xf32>
    %44 = arith.mulf %43, %9 : vector<8x128xf32>
    %45 = arith.addf %38, %44 : vector<8x128xf32>
    %c0_21 = arith.constant 0 : index
    %c0_22 = arith.constant 0 : index
    %46 = vector.load %arg5[%c0_21, %c0_22] : memref<8x128xf32, #tpu.memory_space<vmem>>, vector<8x128xf32>
    tpu.vector_store %arg5[%c0_21, %c0_22], %45 {strides = array<i32>} : memref<8x128xf32, #tpu.memory_space<vmem>>, vector<8x128xf32>,
    return
  }
  func.func @transform_0(%arg0: i32) -> (i32, i32, i32) {
    %c0_i32 = arith.constant 0 : i32
    %c0_i32_0 = arith.constant 0 : i32
    %c0_i32_1 = arith.constant 0 : i32
    return %c0_i32, %arg0, %c0_i32_0 : i32, i32, i32
  }
  func.func @transform_1(%arg0: i32) -> (i32, i32) {
    %c0_i32 = arith.constant 0 : i32
    %c0_i32_0 = arith.constant 0 : i32
    return %arg0, %c0_i32 : i32, i32
  }
  func.func @transform_2(%arg0: i32) -> (i32, i32) {
    %c0_i32 = arith.constant 0 : i32
    %c0_i32_0 = arith.constant 0 : i32
    return %arg0, %c0_i32 : i32, i32
  }
  func.func @transform_3(%arg0: i32) -> (i32, i32) {
    %c0_i32 = arith.constant 0 : i32
    %c0_i32_0 = arith.constant 0 : i32
    return %arg0, %c0_i32 : i32, i32
  }
  func.func @transform_4(%arg0: i32) -> (i32, i32) {
    %c0_i32 = arith.constant 0 : i32
    %c0_i32_0 = arith.constant 0 : i32
    return %arg0, %c0_i32 : i32, i32
  }
}

</mosaic_0001>

<llo_original>
// kernel: tpu_custom_call.1
$region0: #{tpu_custom_call.1}
  #allocation0 [shape = 'u32[]', space=smem, size = 0x4, offset = 0x4, fixed_abs, tag = 'smem constant byte address 0x4 - core index']
  #allocation1 [shape = 'u32[144,128]{1,0:T(1,128)}', space=vmem, size = 0x12000, scoped, tag = 'internal scratch']
  %s0 = inlined_call_operand.hbm [shape: f32[4,8,128], index: 0, kind: input, shape index: {}]
  %s1 = inlined_call_operand.hbm [shape: f32[8,128], index: 1, kind: input, shape index: {}]
  %s2 = inlined_call_operand.hbm [shape: f32[8,128], index: 2, kind: input, shape index: {}]
  %s3 = inlined_call_operand.hbm [shape: f32[8,128], index: 3, kind: output, shape index: {0}]
  %s4 = inlined_call_operand.hbm [shape: f32[8,128], index: 4, kind: output, shape index: {1}]
  %5 = xla_tuple %s3, %s4
  %s6 = sld [smem:[#allocation0]]
  $region42: #{tpu_custom_call.1} parent=0
    _
  %s8 = ssub.s32 1, %s6
  %s9 = scalar_select 0, %s8, %s6
  $region1: #{tpu_custom_call.1} parent=0
    #allocation2 [shape = 'u8[16384]{0}', space=vmem, size = 0x4000, scoped, tag = 'input window, operand 0, single buffered']
    #allocation3 [shape = 's32[1]{0}', space=sflag, size = 0x4, scoped, tag = 'scoped memory for tpu_custom_call.1']
    #allocation4 [shape = 's32[1]{0}', space=sflag, size = 0x4, scoped, tag = 'scoped memory for tpu_custom_call.1']
    #allocation5 [shape = 'u8[4096]{0}', space=vmem, size = 0x1000, scoped, tag = 'input window, operand 1, single buffered']
    #allocation6 [shape = 's32[1]{0}', space=sflag, size = 0x4, scoped, tag = 'scoped memory for tpu_custom_call.1']
    #allocation7 [shape = 'u8[4096]{0}', space=vmem, size = 0x1000, scoped, tag = 'input window, operand 2, single buffered']
    #allocation8 [shape = 'u8[4096]{0}', space=vmem, size = 0x1000, scoped, tag = 'output window, operand 0, single buffered']
    #allocation9 [shape = 'u8[4096]{0}', space=vmem, size = 0x1000, scoped, tag = 'output window, operand 1, single buffered']
    #allocation10 [shape = 's32[1]{0}', space=sflag, size = 0x4, scoped, tag = 'scoped memory for tpu_custom_call.1']
    %10 = vsyncpa [#allocation3], 0
    %11 = vsyncpa [#allocation6], 0
    %12 = vsyncpa [#allocation4], 0
    %13 = vsyncpa [#allocation10], 0
    // Predicated region
    $region2: #{tpu_custom_call.1} parent=1 // pred_check
      _
    $region3: #{tpu_custom_call.1} parent=1 // pred_check_branch
      %15 = sbr.rel (0) target = $region5
    $region4: #{tpu_custom_call.1} parent=1 // pred_region
      %s17 = ssub.s32 512, 512
      %18 = vsyncadd [#allocation3], %s17
      %s19 = sshll.u32 [#allocation2], 4
      %s20 = int_to_ptr.vmem [resolvable:$true] %s19
      %25 = dma.hbm_to_vmem [thread:$0]  %s0, 512, %s20, [#allocation3], 128, 128, 8
    $region5: #{tpu_custom_call.1} parent=1 // pred_fallthru
      _
    // Predicated region
    $region6: #{tpu_custom_call.1} parent=1 // pred_check
      _
    $region7: #{tpu_custom_call.1} parent=1 // pred_check_branch
      %27 = sbr.rel (0) target = $region9
    $region8: #{tpu_custom_call.1} parent=1 // pred_region
      %s29 = ssub.s32 128, 128
      %30 = vsyncadd [#allocation6], %s29
      %s32 = sshll.u32 [#allocation5], 4
      %s33 = int_to_ptr.vmem [resolvable:$true] %s32
      %35 = dma.hbm_to_vmem [thread:$0]  %s1, 128, %s33, [#allocation6]
    $region9: #{tpu_custom_call.1} parent=1 // pred_fallthru
      _
    // Predicated region
    $region10: #{tpu_custom_call.1} parent=1 // pred_check
      _
    $region11: #{tpu_custom_call.1} parent=1 // pred_check_branch
      %37 = sbr.rel (0) target = $region13
    $region12: #{tpu_custom_call.1} parent=1 // pred_region
      %s39 = ssub.s32 128, 128
      %40 = vsyncadd [#allocation6], %s39
      %s42 = sshll.u32 [#allocation7], 4
      %s43 = int_to_ptr.vmem [resolvable:$true] %s42
      %45 = dma.hbm_to_vmem [thread:$0]  %s2, 128, %s43, [#allocation6]
    $region13: #{tpu_custom_call.1} parent=1 // pred_fallthru
      _
    // Predicated region
    $region14: #{tpu_custom_call.1} parent=1 // pred_check
      _
    $region15: #{tpu_custom_call.1} parent=1 // pred_check_branch
      %47 = sbr.rel (0) target = $region17
    $region16: #{tpu_custom_call.1} parent=1 // pred_region
      %48 = dma.done [#allocation3], 512
    $region17: #{tpu_custom_call.1} parent=1 // pred_fallthru
      _
    // Predicated region
    $region18: #{tpu_custom_call.1} parent=1 // pred_check
      _
    $region19: #{tpu_custom_call.1} parent=1 // pred_check_branch
      %50 = sbr.rel (0) target = $region21
    $region20: #{tpu_custom_call.1} parent=1 // pred_region
      %51 = dma.done [#allocation6], 128
    $region21: #{tpu_custom_call.1} parent=1 // pred_fallthru
      _
    // Predicated region
    $region22: #{tpu_custom_call.1} parent=1 // pred_check
      _
    $region23: #{tpu_custom_call.1} parent=1 // pred_check_branch
      %53 = sbr.rel (0) target = $region25
    $region24: #{tpu_custom_call.1} parent=1 // pred_region
      %54 = dma.done [#allocation6], 128
    $region25: #{tpu_custom_call.1} parent=1 // pred_fallthru
      _
    %v55 = vld [vmem:[#allocation5] sm:$0xff]
    %v56 = vld [vmem:[#allocation7] sm:$0xff]
    %v57 = vld [vmem:[#allocation2] sm:$0xff]
    %s58 = scalar_lea.vmem [#allocation2], 8
    %v59 = vld [vmem:[%s58] sm:$0xff]
    %s60 = scalar_lea.vmem [#allocation2], 16
    %v61 = vld [vmem:[%s60] sm:$0xff]
    %s62 = scalar_lea.vmem [#allocation2], 24
    %v63 = vld [vmem:[%s62] sm:$0xff]
    %v64 = vlaneseq
    %v65 = vand.u32 %v64, 127
    %vm66 = vcmp.lt.s32.totalorder %v65, 0
    %v67 = vsub.s32 0, %v65
    %v68 = vsel %vm66, %v67, %v65
    %v69 = vshrl.u32 %v68, 1
    %v70 = vand.u32 %v68, 1
    %v71 = vsub.s32 0, %v70
    %v72 = vsel %vm66, %v71, %v70
    %vm73 = vcmp.ne.s32.totalorder %v72, 0
    %vm74 = vcmp.lt.s32.totalorder %v72, 0
    %vm75 = vmand %vm74, %vm73
    %v76 = vadd.s32 %v72, 2
    %v77 = vsel %vm75, %v76, %v72
    %vm78 = vcmp.eq.s32.totalorder %v77, 0
    %v79 = vmul.f32 %v55, %v57
    %80 = vrot.lane.b32.xlu0 %v55, 127
    %v81 = vpop.permute.xlu0 %80
    %82 = vrot.lane.b32.xlu0 %v55, 1
    %v83 = vpop.permute.xlu0 %82
    %v84 = vsel %vm78, 1, 0
    %vm85 = vcmp.eq.s32.totalorder %v84, 1
    %v86 = vsel %vm85, %v81, %v83
    %v87 = vmul.f32 %v86, %v59
    %v88 = vadd.f32 %v79, %v87
    %89 = vst [vmem:[#allocation8] sm:$0xff] %v88
    %v90 = vmul.f32 %v56, %v61
    %91 = vrot.lane.b32.xlu0 %v56, 127
    %v92 = vpop.permute.xlu0 %91
    %93 = vrot.lane.b32.xlu0 %v56, 1
    %v94 = vpop.permute.xlu0 %93
    %v95 = vsel %vm85, %v92, %v94
    %v96 = vmul.f32 %v95, %v63
    %v97 = vadd.f32 %v90, %v96
    %98 = vst [vmem:[#allocation9] sm:$0xff] %v97
    // Predicated region
    $region26: #{tpu_custom_call.1} parent=1 // pred_check
      _
    $region27: #{tpu_custom_call.1} parent=1 // pred_check_branch
      %100 = sbr.rel (0) target = $region29
    $region28: #{tpu_custom_call.1} parent=1 // pred_region
      %s102 = ssub.s32 128, 128
      %103 = vsyncadd [#allocation4], %s102
      %s105 = sshll.u32 [#allocation8], 4
      %s106 = int_to_ptr.vmem [resolvable:$true] %s105
      %108 = dma.vmem_to_hbm [thread:$0]  %s106, 128, %s3, [#allocation4]
    $region29: #{tpu_custom_call.1} parent=1 // pred_fallthru
      _
    // Predicated region
    $region30: #{tpu_custom_call.1} parent=1 // pred_check
      _
    $region31: #{tpu_custom_call.1} parent=1 // pred_check_branch
      %110 = sbr.rel (0) target = $region33
    $region32: #{tpu_custom_call.1} parent=1 // pred_region
      %s112 = ssub.s32 128, 128
      %113 = vsyncadd [#allocation10], %s112
      %s115 = sshll.u32 [#allocation9], 4
      %s116 = int_to_ptr.vmem [resolvable:$true] %s115
      %118 = dma.vmem_to_hbm [thread:$0]  %s116, 128, %s4, [#allocation10]
    $region33: #{tpu_custom_call.1} parent=1 // pred_fallthru
      _
    // Predicated region
    $region34: #{tpu_custom_call.1} parent=1 // pred_check
      _
    $region35: #{tpu_custom_call.1} parent=1 // pred_check_branch
      %120 = sbr.rel (0) target = $region37
    $region36: #{tpu_custom_call.1} parent=1 // pred_region
      %121 = dma.done [#allocation4], 128
    $region37: #{tpu_custom_call.1} parent=1 // pred_fallthru
      _
    // Predicated region
    $region38: #{tpu_custom_call.1} parent=1 // pred_check
      _
    $region39: #{tpu_custom_call.1} parent=1 // pred_check_branch
      %123 = sbr.rel (0) target = $region41
    $region40: #{tpu_custom_call.1} parent=1 // pred_region
      %124 = dma.done [#allocation10], 128
    $region41: #{tpu_custom_call.1} parent=1 // pred_fallthru
      _
    %125 = vsyncpa [#allocation3], 1
    %126 = vsyncpa [#allocation6], 1
    %127 = vsyncpa [#allocation4], 1
    %128 = vsyncpa [#allocation10], 1

</llo_original>
